<compile_context>
chip_gen: v7x
topology: tpu7x:2x2x1
jax: 0.10.0
libtpu: 0.0.40
codegen_flags: <defaults>
</compile_context>

<pallas_src>
import functools

import jax
import jax.numpy as jnp
import numpy as np
from jax.experimental import pallas as pl
from jax.experimental.pallas import tpu as pltpu

_LANE_W = 1024        # lane-dense width: multiple of 128 -> unmasked vst
_TILE_R_MAX = 1024    # max rows per grid step: (1024, 1024) f32 tile = 4 MiB


def _q_relu_quant_kernel(s_ref, x_ref, o_ref, *, n_lv):
    """Quantization path.  ReLU is absorbed by the clamp to [0, n_lv-1]."""
    x = x_ref[...].astype(jnp.float32)
    k = s_ref[0]       # (n_lv - 1) / softplus(a)   (SMEM scalar)
    scale = s_ref[1]   # softplus(c) / (n_lv - 1)
    y = jnp.round(jnp.clip(x * k, 0.0, float(n_lv - 1))) * scale
    o_ref[...] = y.astype(o_ref.dtype)


def q_relu_forward(x, a_param, c_param, *, n_lv, act_func=True):
    """Forward pass of Q_ReLU.

    x: arbitrary-shaped activation (e.g. NCHW); a_param, c_param: (1,) raw
    (pre-softplus) parameters.
    """
    if n_lv == 0:
        # Plain ReLU / identity: leave it to XLA, which fuses it with the
        # producer/consumer for free (per review).
        return jnp.maximum(x, jnp.zeros((), x.dtype)) if act_func else x

    orig_shape, orig_dtype = x.shape, x.dtype
    total = int(np.prod(orig_shape))
    itemsize = int(np.dtype(orig_dtype).itemsize)

    # Lane-dense 2-D view: rows x 1024.  Pad only the flat tail to a multiple
    # of 1024 (<= 1023 zero elements); no padding at all for aligned shapes.
    rows = -(-total // _LANE_W)
    pad = rows * _LANE_W - total

    # Sublane packing multiple per dtype (f32: 8, bf16: 16, int8/fp8: 32).
    sub = {4: 8, 2: 16, 1: 32}.get(itemsize, 8)

    if rows <= sub:
        # Tiny tensor: single block whose row dim equals the full array dim
        # (allowed by the "equal full dims" rule), grid of 1.
        tile_r = rows
    else:
        # Aim for >= 4 grid steps so v7x's two TensorCores both get work,
        # cap at _TILE_R_MAX rows, round to the sublane multiple.
        target = -(-rows // 4)
        tile_r = max(sub, min(_TILE_R_MAX, -(-target // sub) * sub))
    grid = (pl.cdiv(rows, tile_r),)

    xf = x.reshape(-1)
    if pad:
        # NOTE: only triggers when total % 1024 != 0 (one extra HBM pass for
        # the pad and one for the trailing slice).  Pad value is 0, not NaN.
        xf = jnp.pad(xf, (0, pad))
    x2 = xf.reshape(rows, _LANE_W)

    # Hoist & fold all scalar math out of the per-element path.
    # jax.nn.softplus is numerically stable for large raw params.
    a = jax.nn.softplus(a_param.astype(jnp.float32).reshape(()))
    c = jax.nn.softplus(c_param.astype(jnp.float32).reshape(()))
    k = (n_lv - 1) / a               # folds 1/a with the RoundQuant pre-mul
    # NOTE: n_lv == 1 divides by zero here, exactly like the PyTorch source.
    scale = c / (n_lv - 1)
    s = jnp.stack([k, scale]).astype(jnp.float32)   # single (2,) SMEM operand

    tile_spec = pl.BlockSpec((tile_r, _LANE_W), lambda i: (i, 0))

    out2 = pl.pallas_call(
        functools.partial(_q_relu_quant_kernel, n_lv=n_lv),
        out_shape=jax.ShapeDtypeStruct((rows, _LANE_W), orig_dtype),
        grid=grid,
        in_specs=[
            pl.BlockSpec(memory_space=pltpu.SMEM),   # [k, scale]
            tile_spec,
        ],
        out_specs=tile_spec,
        compiler_params=pltpu.CompilerParams(
            dimension_semantics=("parallel",),       # v7x: shard tiles over 2 TCs
            vmem_limit_bytes=32 * 1024 * 1024,       # v5e needs >16 MiB for 4 MiB tiles
        ),
        cost_estimate=pl.CostEstimate(
            flops=4 * total,
            transcendentals=0,
            bytes_accessed=2 * total * itemsize,
        ),
    )(s, x2)

    out = out2.reshape(-1)
    if pad:
        out = out[:total]
    return out.reshape(orig_shape)


if __name__ == "__main__":
    # Deterministic parameter init, mirroring Q_ReLU.initialize(n_lv, offset, diff):
    #   a = c = log(exp(offset + diff) - 1)
    n_lv = 16
    offset, diff = 3.0, 1.0
    init_val = float(np.log(np.exp(offset + diff) - 1.0))
    a_param = jnp.full((1,), init_val, dtype=jnp.float32)
    c_param = jnp.full((1,), init_val, dtype=jnp.float32)

    # Deterministic input (N, C, H, W) = (2, 4, 16, 16)
    key = jax.random.PRNGKey(0)
    x = jax.random.normal(key, (2, 4, 16, 16), dtype=jnp.float32) * 3.0

    # Pure-JAX reference with the original PyTorch op ordering.
    def ref_fn(xv, ap, cp, nlv, act=True):
        xv = xv.astype(jnp.float32)
        if act:
            xv = jnp.maximum(xv, 0.0)
        if nlv == 0:
            return xv
        a = jax.nn.softplus(ap.astype(jnp.float32))
        c = jax.nn.softplus(cp.astype(jnp.float32))
        y = jnp.clip(xv / a, 0.0, 1.0)
        return jnp.round(y * (nlv - 1)) / (nlv - 1) * c

    # Quantized path (aligned flat size: 2048 elements -> no pad, no slice).
    out = q_relu_forward(x, a_param, c_param, n_lv=n_lv, act_func=True)
    jax.block_until_ready(out)
    ref = ref_fn(x, a_param, c_param, n_lv)
    assert jnp.allclose(out, ref.astype(out.dtype), atol=1e-5), "quant mismatch"

    # n_lv == 0 (plain ReLU) branch.
    out0 = q_relu_forward(x, a_param, c_param, n_lv=0, act_func=True)
    jax.block_until_ready(out0)
    assert jnp.allclose(out0, jnp.maximum(x, 0.0)), "relu branch mismatch"

    # Ragged flat size (1*3*7*7 = 147) -> exercises minimal-pad + masked block.
    x_odd = jax.random.normal(jax.random.PRNGKey(0), (1, 3, 7, 7), jnp.float32) * 2.0
    out_odd = q_relu_forward(x_odd, a_param, c_param, n_lv=4, act_func=True)
    jax.block_until_ready(out_odd)
    ref_odd = ref_fn(x_odd, a_param, c_param, 4)
    assert jnp.allclose(out_odd, ref_odd, atol=1e-5), "odd-shape mismatch"

    # bf16 input -> exercises the 16-row sublane multiple / tiny-row path.
    x_bf = x.astype(jnp.bfloat16)
    out_bf = q_relu_forward(x_bf, a_param, c_param, n_lv=n_lv, act_func=True)
    jax.block_until_ready(out_bf)
    ref_bf = ref_fn(x_bf, a_param, c_param, n_lv).astype(jnp.bfloat16)
    assert jnp.allclose(out_bf.astype(jnp.float32), ref_bf.astype(jnp.float32),
                        atol=5e-2), "bf16 mismatch"

    # TODO(synk): RoundQuant's straight-through backward (custom autograd) is
    # not implemented; only the forward pass is translated.
    print("KERNEL_OK")
</pallas_src>

<mosaic_0001>
module attributes {stable_mosaic.version = 11 : i64} {
  func.func @_q_relu_quant_kernel(%arg0: i32, %arg1: memref<2xf32, #tpu.memory_space<smem>>, %arg2: memref<2x1024xf32, #tpu.memory_space<vmem>>, %arg3: memref<2x1024xf32, #tpu.memory_space<vmem>>) attributes {dimension_semantics = [#tpu.dimension_semantics<parallel>], iteration_bounds = array<i64: 1>, scalar_prefetch = 0 : i64, scratch_operands = 0 : i64, tpu.core_type = #tpu.core_type<tc>, window_params = [{transform_indices = @transform_0, window_bounds = array<i64: 2>}, {transform_indices = @transform_1, window_bounds = array<i64: 2, 1024>}, {transform_indices = @transform_2, window_bounds = array<i64: 2, 1024>}]} {
    %c0 = arith.constant 0 : index
    %c0_0 = arith.constant 0 : index
    %0 = vector.load %arg2[%c0, %c0_0] : memref<2x1024xf32, #tpu.memory_space<vmem>>, vector<2x1024xf32>
    %c0_1 = arith.constant 0 : index
    %1 = memref.load %arg1[%c0_1] : memref<2xf32, #tpu.memory_space<smem>>
    %c1 = arith.constant 1 : index
    %2 = memref.load %arg1[%c1] : memref<2xf32, #tpu.memory_space<smem>>
    %3 = vector.broadcast %1 : f32 to vector<2x1024xf32>
    %4 = arith.mulf %0, %3 : vector<2x1024xf32>
    %cst = arith.constant 0.000000e+00 : f32
    %cst_2 = arith.constant 1.500000e+01 : f32
    %5 = vector.broadcast %cst : f32 to vector<2x1024xf32>
    %6 = arith.maximumf %5, %4 : vector<2x1024xf32>
    %7 = vector.broadcast %cst_2 : f32 to vector<2x1024xf32>
    %8 = arith.minimumf %7, %6 : vector<2x1024xf32>
    %9 = math.roundeven %8 : vector<2x1024xf32>
    %10 = vector.broadcast %2 : f32 to vector<2x1024xf32>
    %11 = arith.mulf %9, %10 : vector<2x1024xf32>
    %c0_3 = arith.constant 0 : index
    %c0_4 = arith.constant 0 : index
    %12 = vector.load %arg3[%c0_3, %c0_4] : memref<2x1024xf32, #tpu.memory_space<vmem>>, vector<2x1024xf32>
    tpu.vector_store %arg3[%c0_3, %c0_4], %11 {strides = array<i32>} : memref<2x1024xf32, #tpu.memory_space<vmem>>, vector<2x1024xf32>,
    return
  }
  func.func @transform_0(%arg0: i32) -> i32 {
    %c0_i32 = arith.constant 0 : i32
    %c0_i32_0 = arith.constant 0 : i32
    return %c0_i32 : i32
  }
  func.func @transform_1(%arg0: i32) -> (i32, i32) {
    %c0_i32 = arith.constant 0 : i32
    %c0_i32_0 = arith.constant 0 : i32
    return %arg0, %c0_i32 : i32, i32
  }
  func.func @transform_2(%arg0: i32) -> (i32, i32) {
    %c0_i32 = arith.constant 0 : i32
    %c0_i32_0 = arith.constant 0 : i32
    return %arg0, %c0_i32 : i32, i32
  }
}

</mosaic_0001>

<llo_original>
// kernel: tpu_custom_call.1
$region0: #{tpu_custom_call.1}
  #allocation0 [shape = 'u32[]', space=smem, size = 0x4, offset = 0x4, fixed_abs, tag = 'smem constant byte address 0x4 - core index']
  #allocation1 [shape = 'u32[144,128]{1,0:T(1,128)}', space=vmem, size = 0x12000, scoped, tag = 'internal scratch']
  %s0 = inlined_call_operand.hbm [shape: f32[2], index: 0, kind: input, shape index: {}]
  %s1 = inlined_call_operand.hbm [shape: f32[2,1024], index: 1, kind: input, shape index: {}]
  %s2 = inlined_call_operand.hbm [shape: f32[2,1024], index: 2, kind: output, shape index: {}]
  %s3 = sld [smem:[#allocation0]]
  $region26: #{tpu_custom_call.1} parent=0
    _
  %s5 = ssub.s32 1, %s3
  %s6 = scalar_select 0, %s5, %s3
  $region1: #{tpu_custom_call.1} parent=0
    #allocation2 [shape = 'u8[512]{0}', space=smem, size = 0x200, scoped, tag = 'input window, operand 0, single buffered']
    #allocation3 [shape = 's32[1]{0}', space=sflag, size = 0x4, scoped, tag = 'scoped memory for tpu_custom_call.1']
    #allocation4 [shape = 's32[1]{0}', space=sflag, size = 0x4, scoped, tag = 'scoped memory for tpu_custom_call.1']
    #allocation5 [shape = 's32[1]{0}', space=sflag, size = 0x4, scoped, tag = 'scoped memory for tpu_custom_call.1']
    #allocation6 [shape = 'u8[8192]{0}', space=vmem, size = 0x2000, scoped, tag = 'input window, operand 1, single buffered']
    #allocation7 [shape = 'u8[8192]{0}', space=vmem, size = 0x2000, scoped, tag = 'output window, operand 0, single buffered']
    %7 = vsyncpa [#allocation5], 0
    %8 = vsyncpa [#allocation3], 0
    %9 = vsyncpa [#allocation4], 0
    // Predicated region
    $region2: #{tpu_custom_call.1} parent=1 // pred_check
      _
    $region3: #{tpu_custom_call.1} parent=1 // pred_check_branch
      %11 = sbr.rel (0) target = $region5
    $region4: #{tpu_custom_call.1} parent=1 // pred_region
      %s13 = ssub.s32 16, 16
      %14 = vsyncadd [#allocation5], %s13
      %17 = dma.hbm_to_smem %s0, 16, [#allocation2], [#allocation5]
    $region5: #{tpu_custom_call.1} parent=1 // pred_fallthru
      _
    // Predicated region
    $region6: #{tpu_custom_call.1} parent=1 // pred_check
      _
    $region7: #{tpu_custom_call.1} parent=1 // pred_check_branch
      %19 = sbr.rel (0) target = $region9
    $region8: #{tpu_custom_call.1} parent=1 // pred_region
      %s21 = ssub.s32 256, 256
      %22 = vsyncadd [#allocation3], %s21
      %s24 = sshll.u32 [#allocation6], 4
      %s25 = int_to_ptr.vmem [resolvable:$true] %s24
      %27 = dma.hbm_to_vmem [thread:$0]  %s1, 256, %s25, [#allocation3]
    $region9: #{tpu_custom_call.1} parent=1 // pred_fallthru
      _
    // Predicated region
    $region10: #{tpu_custom_call.1} parent=1 // pred_check
      _
    $region11: #{tpu_custom_call.1} parent=1 // pred_check_branch
      %29 = sbr.rel (0) target = $region13
    $region12: #{tpu_custom_call.1} parent=1 // pred_region
      %30 = dma.done [#allocation5], 16
    $region13: #{tpu_custom_call.1} parent=1 // pred_fallthru
      _
    // Predicated region
    $region14: #{tpu_custom_call.1} parent=1 // pred_check
      _
    $region15: #{tpu_custom_call.1} parent=1 // pred_check_branch
      %32 = sbr.rel (0) target = $region17
    $region16: #{tpu_custom_call.1} parent=1 // pred_region
      %33 = dma.done [#allocation3], 256
    $region17: #{tpu_custom_call.1} parent=1 // pred_fallthru
      _
    %34 = sfence
    %v35 = vld [vmem:[#allocation6] sm:$0xff]
    %v36 = vld [vmem:[#allocation6 + $0x8] sm:$0xff]
    %s37 = sld [smem:[#allocation2]]
    %s38 = sld [smem:[#allocation2 + $0x1]]
    %v39 = vstv %s37
    %v40 = vmul.f32 %v35, %v39
    %v41 = vmul.f32 %v36, %v39
    %v42 = vmax.f32 %v40, 0.0
    %v43 = vmax.f32 %v41, 0.0
    %v44 = vmin.f32 %v42, 15.0
    %v45 = vmin.f32 %v43, 15.0
    %v46 = vround.ne.pseudo %v44
    %v47 = vround.ne.pseudo %v45
    %v48 = vstv %s38
    %v49 = vmul.f32 %v46, %v48
    %v50 = vmul.f32 %v47, %v48
    %51 = vst [vmem:[#allocation7] sm:$0xff] %v49
    %52 = vst [vmem:[#allocation7 + $0x8] sm:$0xff] %v50
    // Predicated region
    $region18: #{tpu_custom_call.1} parent=1 // pred_check
      _
    $region19: #{tpu_custom_call.1} parent=1 // pred_check_branch
      %54 = sbr.rel (0) target = $region21
    $region20: #{tpu_custom_call.1} parent=1 // pred_region
      %s56 = ssub.s32 256, 256
      %57 = vsyncadd [#allocation4], %s56
      %s59 = sshll.u32 [#allocation7], 4
      %s60 = int_to_ptr.vmem [resolvable:$true] %s59
      %62 = dma.vmem_to_hbm [thread:$0]  %s60, 256, %s2, [#allocation4]
    $region21: #{tpu_custom_call.1} parent=1 // pred_fallthru
      _
    // Predicated region
    $region22: #{tpu_custom_call.1} parent=1 // pred_check
      _
    $region23: #{tpu_custom_call.1} parent=1 // pred_check_branch
      %64 = sbr.rel (0) target = $region25
    $region24: #{tpu_custom_call.1} parent=1 // pred_region
      %65 = dma.done [#allocation4], 256
    $region25: #{tpu_custom_call.1} parent=1 // pred_fallthru
      _
    %66 = vsyncpa [#allocation3], 1
    %67 = vsyncpa [#allocation4], 1
    %68 = vsyncpa [#allocation5], 1

</llo_original>
